<compile_context>
chip_gen: v7x
topology: tpu7x:2x2x1
jax: 0.10.0
libtpu: 0.0.40
codegen_flags: <defaults>
</compile_context>

<pallas_src>
import jax
import jax.numpy as jnp
from jax.experimental import pallas as pl
from jax.experimental.pallas import tpu as pltpu


def _lstm_fc_kernel(xw_ref, whh_ref, wfc_ref, bfc_ref, out_ref):
    """xw_ref:  (T, B, 4H)  precomputed x@W_ih^T + bias, time-major
       whh_ref: (H, 4H)     recurrent weights, pre-transposed
       wfc_ref: (O, H)      fc weights (row-major, PyTorch layout)
       bfc_ref: (1, O)      fc bias
       out_ref: (B, O)
    """
    T, B, _ = xw_ref.shape
    H = whh_ref.shape[0]
    O = wfc_ref.shape[0]

    w_hh = whh_ref[...]                      # hoist the (H, 4H) load out of the loop

    def step(t, carry):
        h, c = carry
        # Sequential part only: recurrent matmul + precomputed input projection.
        gates = xw_ref[t] + jnp.dot(h, w_hh, preferred_element_type=jnp.float32)
        i_g = jax.nn.sigmoid(gates[:, 0 * H:1 * H])
        f_g = jax.nn.sigmoid(gates[:, 1 * H:2 * H])
        g_g = jnp.tanh(gates[:, 2 * H:3 * H])
        o_g = jax.nn.sigmoid(gates[:, 3 * H:4 * H])
        c_new = f_g * c + i_g * g_g
        h_new = o_g * jnp.tanh(c_new)
        return (h_new, c_new)

    h0 = jnp.zeros((B, H), jnp.float32)
    c0 = jnp.zeros((B, H), jnp.float32)
    # T is static -> fully unrolled; h/c stay in vregs across timesteps.
    h_T, _ = jax.lax.fori_loop(0, T, step, (h0, c0), unroll=True)

    if O == 1:
        # VPU multiply + lane reduce: avoids pushing the MXU for an N=1 result.
        out_ref[...] = (jnp.sum(h_T * wfc_ref[...], axis=-1, keepdims=True)
                        + bfc_ref[...])
    else:
        out_ref[...] = (jnp.einsum('bh,oh->bo', h_T, wfc_ref[...],
                                   preferred_element_type=jnp.float32)
                        + bfc_ref[...])


def temperature_net_forward(x, params):
    """x: (B, T, I) float32, batch-first like PyTorch. Returns (B, output_size)."""
    w_ih_t, w_hh_t, bias, w_fc, b_fc = params
    B, T, I = x.shape
    H = w_hh_t.shape[0]
    O = w_fc.shape[0]
    assert w_ih_t.shape == (I, 4 * H)
    assert bias.shape == (1, 4 * H)
    assert w_fc.shape == (O, H) and b_fc.shape == (1, O)

    # Time-parallel input projection (+ folded bias), done once as a single XLA matmul.
    # Emitted time-major (T, B, 4H) so the kernel indexes the leading axis.
    xw = (jnp.einsum('bti,ig->tbg', x, w_ih_t) + bias).astype(jnp.float32)

    # Total VMEM footprint (xw + weights + output) is < 50 KiB -> single invocation,
    # whole arrays resident, no grid / no pipelining needed on v5e/v6e/v7x.
    out = pl.pallas_call(
        _lstm_fc_kernel,
        out_shape=jax.ShapeDtypeStruct((B, O), jnp.float32),
        in_specs=[
            pl.BlockSpec(memory_space=pltpu.MemorySpace.VMEM),   # xw   (T, B, 4H)
            pl.BlockSpec(memory_space=pltpu.MemorySpace.VMEM),   # W_hh^T (H, 4H)
            pl.BlockSpec(memory_space=pltpu.MemorySpace.VMEM),   # W_fc   (O, H)
            pl.BlockSpec(memory_space=pltpu.MemorySpace.VMEM),   # b_fc   (1, O)
        ],
        out_specs=pl.BlockSpec(memory_space=pltpu.MemorySpace.VMEM),
    )(xw, w_hh_t, w_fc, b_fc)
    return out


def init_params(key, input_size, hidden_size, output_size):
    """Deterministic synthetic params (PyTorch-style uniform(-1/sqrt(H), 1/sqrt(H)))."""
    k = 1.0 / jnp.sqrt(jnp.float32(hidden_size))
    ks = jax.random.split(key, 6)
    # LSTM weights stored pre-transposed: (in_features, 4H) so kernel matmuls are row-major.
    w_ih_t = jax.random.uniform(ks[0], (input_size, 4 * hidden_size), jnp.float32, -k, k)
    w_hh_t = jax.random.uniform(ks[1], (hidden_size, 4 * hidden_size), jnp.float32, -k, k)
    b_ih = jax.random.uniform(ks[2], (4 * hidden_size,), jnp.float32, -k, k)
    b_hh = jax.random.uniform(ks[3], (4 * hidden_size,), jnp.float32, -k, k)
    bias = (b_ih + b_hh).reshape(1, 4 * hidden_size)
    # fc kept in PyTorch (out_features, in_features) layout for the VPU-reduce path.
    w_fc = jax.random.uniform(ks[4], (output_size, hidden_size), jnp.float32, -k, k)
    b_fc = jax.random.uniform(ks[5], (output_size,), jnp.float32, -k, k).reshape(1, output_size)
    return (w_ih_t, w_hh_t, bias, w_fc, b_fc)


def reference_forward(x, params):
    """Pure-JAX reference (lax.scan LSTM + fc) for correctness checking."""
    w_ih_t, w_hh_t, bias, w_fc, b_fc = params
    B = x.shape[0]
    H = w_hh_t.shape[0]

    def step(carry, x_t):
        h, c = carry
        gates = x_t @ w_ih_t + h @ w_hh_t + bias
        i = jax.nn.sigmoid(gates[:, 0 * H:1 * H])
        f = jax.nn.sigmoid(gates[:, 1 * H:2 * H])
        g = jnp.tanh(gates[:, 2 * H:3 * H])
        o = jax.nn.sigmoid(gates[:, 3 * H:4 * H])
        c = f * c + i * g
        h = o * jnp.tanh(c)
        return (h, c), None

    h0 = jnp.zeros((B, H), jnp.float32)
    c0 = jnp.zeros((B, H), jnp.float32)
    (h_T, _), _ = jax.lax.scan(step, (h0, c0), jnp.transpose(x, (1, 0, 2)))
    return h_T @ w_fc.T + b_fc


if __name__ == "__main__":
    # Small shapes consistent with the module: univariate temperature sequence.
    # H=32 keeps 4H=128 lane-aligned (module default H=50 also works, just less aligned).
    B, T, I, H, O = 8, 8, 1, 32, 1

    key = jax.random.PRNGKey(0)
    k_x, k_p = jax.random.split(key)
    x = jax.random.normal(k_x, (B, T, I), jnp.float32)
    params = init_params(k_p, I, H, O)

    out = temperature_net_forward(x, params)
    out = jax.block_until_ready(out)

    ref = reference_forward(x, params)
    assert out.shape == (B, O)
    assert jnp.allclose(out, ref, atol=1e-5, rtol=1e-5), "Pallas output mismatch vs reference"

    print("KERNEL_OK")
</pallas_src>

<mosaic_0001>
module attributes {stable_mosaic.version = 11 : i64} {
  func.func @_lstm_fc_kernel(%arg0: memref<8x8x128xf32, #tpu.memory_space<vmem>>, %arg1: memref<32x128xf32, #tpu.memory_space<vmem>>, %arg2: memref<1x32xf32, #tpu.memory_space<vmem>>, %arg3: memref<1x1xf32, #tpu.memory_space<vmem>>, %arg4: memref<8x1xf32, #tpu.memory_space<vmem>>) attributes {dimension_semantics = [], scalar_prefetch = 0 : i64, scratch_operands = 0 : i64, tpu.core_type = #tpu.core_type<tc>} {
    %c0 = arith.constant 0 : index
    %c0_0 = arith.constant 0 : index
    %0 = vector.load %arg1[%c0, %c0_0] : memref<32x128xf32, #tpu.memory_space<vmem>>, vector<32x128xf32>
    %cst = arith.constant 0.000000e+00 : f32
    %1 = vector.broadcast %cst : f32 to vector<8x32xf32>
    %cst_1 = arith.constant 0.000000e+00 : f32
    %2 = vector.broadcast %cst_1 : f32 to vector<8x32xf32>
    %c0_i32 = arith.constant 0 : i32
    %3 = arith.index_cast %c0_i32 : i32 to index
    %c0_2 = arith.constant 0 : index
    %c0_3 = arith.constant 0 : index
    %4 = vector.load %arg0[%3, %c0_2, %c0_3] : memref<8x8x128xf32, #tpu.memory_space<vmem>>, vector<1x8x128xf32>
    %5 = vector.shape_cast %4 : vector<1x8x128xf32> to vector<8x128xf32>
    %cst_4 = arith.constant dense<0.000000e+00> : vector<8x128xf32>
    %6 = tpu.matmul %1, %0, %cst_4 {dimension_numbers = #tpu.dot_dimension_numbers<[1], [0], [0], [1], [0, 0, 1, 1], [], []>} : vector<8x32xf32>, vector<32x128xf32>, vector<8x128xf32> -> vector<8x128xf32>
    %7 = arith.addf %5, %6 : vector<8x128xf32>
    %8 = vector.extract_strided_slice %7 {offsets = [0, 0], sizes = [8, 32], strides = [1, 1]} : vector<8x128xf32> to vector<8x32xf32>
    %9 = arith.negf %8 : vector<8x32xf32>
    %10 = math.exp %9 : vector<8x32xf32>
    %cst_5 = arith.constant 1.000000e+00 : f32
    %11 = vector.broadcast %cst_5 : f32 to vector<8x32xf32>
    %12 = arith.addf %11, %10 : vector<8x32xf32>
    %13 = arith.divf %11, %12 : vector<8x32xf32>
    %14 = vector.extract_strided_slice %7 {offsets = [0, 32], sizes = [8, 32], strides = [1, 1]} : vector<8x128xf32> to vector<8x32xf32>
    %15 = arith.negf %14 : vector<8x32xf32>
    %16 = math.exp %15 : vector<8x32xf32>
    %cst_6 = arith.constant 1.000000e+00 : f32
    %17 = vector.broadcast %cst_6 : f32 to vector<8x32xf32>
    %18 = arith.addf %17, %16 : vector<8x32xf32>
    %19 = arith.divf %17, %18 : vector<8x32xf32>
    %20 = vector.extract_strided_slice %7 {offsets = [0, 64], sizes = [8, 32], strides = [1, 1]} : vector<8x128xf32> to vector<8x32xf32>
    %21 = math.tanh %20 : vector<8x32xf32>
    %22 = vector.extract_strided_slice %7 {offsets = [0, 96], sizes = [8, 32], strides = [1, 1]} : vector<8x128xf32> to vector<8x32xf32>
    %23 = arith.negf %22 : vector<8x32xf32>
    %24 = math.exp %23 : vector<8x32xf32>
    %cst_7 = arith.constant 1.000000e+00 : f32
    %25 = vector.broadcast %cst_7 : f32 to vector<8x32xf32>
    %26 = arith.addf %25, %24 : vector<8x32xf32>
    %27 = arith.divf %25, %26 : vector<8x32xf32>
    %28 = arith.mulf %19, %2 : vector<8x32xf32>
    %29 = arith.mulf %13, %21 : vector<8x32xf32>
    %30 = arith.addf %28, %29 : vector<8x32xf32>
    %31 = math.tanh %30 : vector<8x32xf32>
    %32 = arith.mulf %27, %31 : vector<8x32xf32>
    %c1_i32 = arith.constant 1 : i32
    %33 = arith.index_cast %c1_i32 : i32 to index
    %c0_8 = arith.constant 0 : index
    %c0_9 = arith.constant 0 : index
    %34 = vector.load %arg0[%33, %c0_8, %c0_9] : memref<8x8x128xf32, #tpu.memory_space<vmem>>, vector<1x8x128xf32>
    %35 = vector.shape_cast %34 : vector<1x8x128xf32> to vector<8x128xf32>
    %cst_10 = arith.constant dense<0.000000e+00> : vector<8x128xf32>
    %36 = tpu.matmul %32, %0, %cst_10 {dimension_numbers = #tpu.dot_dimension_numbers<[1], [0], [0], [1], [0, 0, 1, 1], [], []>} : vector<8x32xf32>, vector<32x128xf32>, vector<8x128xf32> -> vector<8x128xf32>
    %37 = arith.addf %35, %36 : vector<8x128xf32>
    %38 = vector.extract_strided_slice %37 {offsets = [0, 0], sizes = [8, 32], strides = [1, 1]} : vector<8x128xf32> to vector<8x32xf32>
    %39 = arith.negf %38 : vector<8x32xf32>
    %40 = math.exp %39 : vector<8x32xf32>
    %cst_11 = arith.constant 1.000000e+00 : f32
    %41 = vector.broadcast %cst_11 : f32 to vector<8x32xf32>
    %42 = arith.addf %41, %40 : vector<8x32xf32>
    %43 = arith.divf %41, %42 : vector<8x32xf32>
    %44 = vector.extract_strided_slice %37 {offsets = [0, 32], sizes = [8, 32], strides = [1, 1]} : vector<8x128xf32> to vector<8x32xf32>
    %45 = arith.negf %44 : vector<8x32xf32>
    %46 = math.exp %45 : vector<8x32xf32>
    %cst_12 = arith.constant 1.000000e+00 : f32
    %47 = vector.broadcast %cst_12 : f32 to vector<8x32xf32>
    %48 = arith.addf %47, %46 : vector<8x32xf32>
    %49 = arith.divf %47, %48 : vector<8x32xf32>
    %50 = vector.extract_strided_slice %37 {offsets = [0, 64], sizes = [8, 32], strides = [1, 1]} : vector<8x128xf32> to vector<8x32xf32>
    %51 = math.tanh %50 : vector<8x32xf32>
    %52 = vector.extract_strided_slice %37 {offsets = [0, 96], sizes = [8, 32], strides = [1, 1]} : vector<8x128xf32> to vector<8x32xf32>
    %53 = arith.negf %52 : vector<8x32xf32>
    %54 = math.exp %53 : vector<8x32xf32>
    %cst_13 = arith.constant 1.000000e+00 : f32
    %55 = vector.broadcast %cst_13 : f32 to vector<8x32xf32>
    %56 = arith.addf %55, %54 : vector<8x32xf32>
    %57 = arith.divf %55, %56 : vector<8x32xf32>
    %58 = arith.mulf %49, %30 : vector<8x32xf32>
    %59 = arith.mulf %43, %51 : vector<8x32xf32>
    %60 = arith.addf %58, %59 : vector<8x32xf32>
    %61 = math.tanh %60 : vector<8x32xf32>
    %62 = arith.mulf %57, %61 : vector<8x32xf32>
    %c2_i32 = arith.constant 2 : i32
    %63 = arith.index_cast %c2_i32 : i32 to index
    %c0_14 = arith.constant 0 : index
    %c0_15 = arith.constant 0 : index
    %64 = vector.load %arg0[%63, %c0_14, %c0_15] : memref<8x8x128xf32, #tpu.memory_space<vmem>>, vector<1x8x128xf32>
    %65 = vector.shape_cast %64 : vector<1x8x128xf32> to vector<8x128xf32>
    %cst_16 = arith.constant dense<0.000000e+00> : vector<8x128xf32>
    %66 = tpu.matmul %62, %0, %cst_16 {dimension_numbers = #tpu.dot_dimension_numbers<[1], [0], [0], [1], [0, 0, 1, 1], [], []>} : vector<8x32xf32>, vector<32x128xf32>, vector<8x128xf32> -> vector<8x128xf32>
    %67 = arith.addf %65, %66 : vector<8x128xf32>
    %68 = vector.extract_strided_slice %67 {offsets = [0, 0], sizes = [8, 32], strides = [1, 1]} : vector<8x128xf32> to vector<8x32xf32>
    %69 = arith.negf %68 : vector<8x32xf32>
    %70 = math.exp %69 : vector<8x32xf32>
    %cst_17 = arith.constant 1.000000e+00 : f32
    %71 = vector.broadcast %cst_17 : f32 to vector<8x32xf32>
    %72 = arith.addf %71, %70 : vector<8x32xf32>
    %73 = arith.divf %71, %72 : vector<8x32xf32>
    %74 = vector.extract_strided_slice %67 {offsets = [0, 32], sizes = [8, 32], strides = [1, 1]} : vector<8x128xf32> to vector<8x32xf32>
    %75 = arith.negf %74 : vector<8x32xf32>
    %76 = math.exp %75 : vector<8x32xf32>
    %cst_18 = arith.constant 1.000000e+00 : f32
    %77 = vector.broadcast %cst_18 : f32 to vector<8x32xf32>
    %78 = arith.addf %77, %76 : vector<8x32xf32>
    %79 = arith.divf %77, %78 : vector<8x32xf32>
    %80 = vector.extract_strided_slice %67 {offsets = [0, 64], sizes = [8, 32], strides = [1, 1]} : vector<8x128xf32> to vector<8x32xf32>
    %81 = math.tanh %80 : vector<8x32xf32>
    %82 = vector.extract_strided_slice %67 {offsets = [0, 96], sizes = [8, 32], strides = [1, 1]} : vector<8x128xf32> to vector<8x32xf32>
    %83 = arith.negf %82 : vector<8x32xf32>
    %84 = math.exp %83 : vector<8x32xf32>
    %cst_19 = arith.constant 1.000000e+00 : f32
    %85 = vector.broadcast %cst_19 : f32 to vector<8x32xf32>
    %86 = arith.addf %85, %84 : vector<8x32xf32>
    %87 = arith.divf %85, %86 : vector<8x32xf32>
    %88 = arith.mulf %79, %60 : vector<8x32xf32>
    %89 = arith.mulf %73, %81 : vector<8x32xf32>
    %90 = arith.addf %88, %89 : vector<8x32xf32>
    %91 = math.tanh %90 : vector<8x32xf32>
    %92 = arith.mulf %87, %91 : vector<8x32xf32>
    %c3_i32 = arith.constant 3 : i32
    %93 = arith.index_cast %c3_i32 : i32 to index
    %c0_20 = arith.constant 0 : index
    %c0_21 = arith.constant 0 : index
    %94 = vector.load %arg0[%93, %c0_20, %c0_21] : memref<8x8x128xf32, #tpu.memory_space<vmem>>, vector<1x8x128xf32>
    %95 = vector.shape_cast %94 : vector<1x8x128xf32> to vector<8x128xf32>
    %cst_22 = arith.constant dense<0.000000e+00> : vector<8x128xf32>
    %96 = tpu.matmul %92, %0, %cst_22 {dimension_numbers = #tpu.dot_dimension_numbers<[1], [0], [0], [1], [0, 0, 1, 1], [], []>} : vector<8x32xf32>, vector<32x128xf32>, vector<8x128xf32> -> vector<8x128xf32>
    %97 = arith.addf %95, %96 : vector<8x128xf32>
    %98 = vector.extract_strided_slice %97 {offsets = [0, 0], sizes = [8, 32], strides = [1, 1]} : vector<8x128xf32> to vector<8x32xf32>
    %99 = arith.negf %98 : vector<8x32xf32>
    %100 = math.exp %99 : vector<8x32xf32>
    %cst_23 = arith.constant 1.000000e+00 : f32
    %101 = vector.broadcast %cst_23 : f32 to vector<8x32xf32>
    %102 = arith.addf %101, %100 : vector<8x32xf32>
    %103 = arith.divf %101, %102 : vector<8x32xf32>
    %104 = vector.extract_strided_slice %97 {offsets = [0, 32], sizes = [8, 32], strides = [1, 1]} : vector<8x128xf32> to vector<8x32xf32>
    %105 = arith.negf %104 : vector<8x32xf32>
    %106 = math.exp %105 : vector<8x32xf32>
    %cst_24 = arith.constant 1.000000e+00 : f32
    %107 = vector.broadcast %cst_24 : f32 to vector<8x32xf32>
    %108 = arith.addf %107, %106 : vector<8x32xf32>
    %109 = arith.divf %107, %108 : vector<8x32xf32>
    %110 = vector.extract_strided_slice %97 {offsets = [0, 64], sizes = [8, 32], strides = [1, 1]} : vector<8x128xf32> to vector<8x32xf32>
    %111 = math.tanh %110 : vector<8x32xf32>
    %112 = vector.extract_strided_slice %97 {offsets = [0, 96], sizes = [8, 32], strides = [1, 1]} : vector<8x128xf32> to vector<8x32xf32>
    %113 = arith.negf %112 : vector<8x32xf32>
    %114 = math.exp %113 : vector<8x32xf32>
    %cst_25 = arith.constant 1.000000e+00 : f32
    %115 = vector.broadcast %cst_25 : f32 to vector<8x32xf32>
    %116 = arith.addf %115, %114 : vector<8x32xf32>
    %117 = arith.divf %115, %116 : vector<8x32xf32>
    %118 = arith.mulf %109, %90 : vector<8x32xf32>
    %119 = arith.mulf %103, %111 : vector<8x32xf32>
    %120 = arith.addf %118, %119 : vector<8x32xf32>
    %121 = math.tanh %120 : vector<8x32xf32>
    %122 = arith.mulf %117, %121 : vector<8x32xf32>
    %c4_i32 = arith.constant 4 : i32
    %123 = arith.index_cast %c4_i32 : i32 to index
    %c0_26 = arith.constant 0 : index
    %c0_27 = arith.constant 0 : index
    %124 = vector.load %arg0[%123, %c0_26, %c0_27] : memref<8x8x128xf32, #tpu.memory_space<vmem>>, vector<1x8x128xf32>
    %125 = vector.shape_cast %124 : vector<1x8x128xf32> to vector<8x128xf32>
    %cst_28 = arith.constant dense<0.000000e+00> : vector<8x128xf32>
    %126 = tpu.matmul %122, %0, %cst_28 {dimension_numbers = #tpu.dot_dimension_numbers<[1], [0], [0], [1], [0, 0, 1, 1], [], []>} : vector<8x32xf32>, vector<32x128xf32>, vector<8x128xf32> -> vector<8x128xf32>
    %127 = arith.addf %125, %126 : vector<8x128xf32>
    %128 = vector.extract_strided_slice %127 {offsets = [0, 0], sizes = [8, 32], strides = [1, 1]} : vector<8x128xf32> to vector<8x32xf32>
    %129 = arith.negf %128 : vector<8x32xf32>
    %130 = math.exp %129 : vector<8x32xf32>
    %cst_29 = arith.constant 1.000000e+00 : f32
    %131 = vector.broadcast %cst_29 : f32 to vector<8x32xf32>
    %132 = arith.addf %131, %130 : vector<8x32xf32>
    %133 = arith.divf %131, %132 : vector<8x32xf32>
    %134 = vector.extract_strided_slice %127 {offsets = [0, 32], sizes = [8, 32], strides = [1, 1]} : vector<8x128xf32> to vector<8x32xf32>
    %135 = arith.negf %134 : vector<8x32xf32>
    %136 = math.exp %135 : vector<8x32xf32>
    %cst_30 = arith.constant 1.000000e+00 : f32
    %137 = vector.broadcast %cst_30 : f32 to vector<8x32xf32>
    %138 = arith.addf %137, %136 : vector<8x32xf32>
    %139 = arith.divf %137, %138 : vector<8x32xf32>
    %140 = vector.extract_strided_slice %127 {offsets = [0, 64], sizes = [8, 32], strides = [1, 1]} : vector<8x128xf32> to vector<8x32xf32>
    %141 = math.tanh %140 : vector<8x32xf32>
    %142 = vector.extract_strided_slice %127 {offsets = [0, 96], sizes = [8, 32], strides = [1, 1]} : vector<8x128xf32> to vector<8x32xf32>
    %143 = arith.negf %142 : vector<8x32xf32>
    %144 = math.exp %143 : vector<8x32xf32>
    %cst_31 = arith.constant 1.000000e+00 : f32
    %145 = vector.broadcast %cst_31 : f32 to vector<8x32xf32>
    %146 = arith.addf %145, %144 : vector<8x32xf32>
    %147 = arith.divf %145, %146 : vector<8x32xf32>
    %148 = arith.mulf %139, %120 : vector<8x32xf32>
    %149 = arith.mulf %133, %141 : vector<8x32xf32>
    %150 = arith.addf %148, %149 : vector<8x32xf32>
    %151 = math.tanh %150 : vector<8x32xf32>
    %152 = arith.mulf %147, %151 : vector<8x32xf32>
    %c5_i32 = arith.constant 5 : i32
    %153 = arith.index_cast %c5_i32 : i32 to index
    %c0_32 = arith.constant 0 : index
    %c0_33 = arith.constant 0 : index
    %154 = vector.load %arg0[%153, %c0_32, %c0_33] : memref<8x8x128xf32, #tpu.memory_space<vmem>>, vector<1x8x128xf32>
    %155 = vector.shape_cast %154 : vector<1x8x128xf32> to vector<8x128xf32>
    %cst_34 = arith.constant dense<0.000000e+00> : vector<8x128xf32>
    %156 = tpu.matmul %152, %0, %cst_34 {dimension_numbers = #tpu.dot_dimension_numbers<[1], [0], [0], [1], [0, 0, 1, 1], [], []>} : vector<8x32xf32>, vector<32x128xf32>, vector<8x128xf32> -> vector<8x128xf32>
    %157 = arith.addf %155, %156 : vector<8x128xf32>
    %158 = vector.extract_strided_slice %157 {offsets = [0, 0], sizes = [8, 32], strides = [1, 1]} : vector<8x128xf32> to vector<8x32xf32>
    %159 = arith.negf %158 : vector<8x32xf32>
    %160 = math.exp %159 : vector<8x32xf32>
    %cst_35 = arith.constant 1.000000e+00 : f32
    %161 = vector.broadcast %cst_35 : f32 to vector<8x32xf32>
    %162 = arith.addf %161, %160 : vector<8x32xf32>
    %163 = arith.divf %161, %162 : vector<8x32xf32>
    %164 = vector.extract_strided_slice %157 {offsets = [0, 32], sizes = [8, 32], strides = [1, 1]} : vector<8x128xf32> to vector<8x32xf32>
    %165 = arith.negf %164 : vector<8x32xf32>
    %166 = math.exp %165 : vector<8x32xf32>
    %cst_36 = arith.constant 1.000000e+00 : f32
    %167 = vector.broadcast %cst_36 : f32 to vector<8x32xf32>
    %168 = arith.addf %167, %166 : vector<8x32xf32>
    %169 = arith.divf %167, %168 : vector<8x32xf32>
    %170 = vector.extract_strided_slice %157 {offsets = [0, 64], sizes = [8, 32], strides = [1, 1]} : vector<8x128xf32> to vector<8x32xf32>
    %171 = math.tanh %170 : vector<8x32xf32>
    %172 = vector.extract_strided_slice %157 {offsets = [0, 96], sizes = [8, 32], strides = [1, 1]} : vector<8x128xf32> to vector<8x32xf32>
    %173 = arith.negf %172 : vector<8x32xf32>
    %174 = math.exp %173 : vector<8x32xf32>
    %cst_37 = arith.constant 1.000000e+00 : f32
    %175 = vector.broadcast %cst_37 : f32 to vector<8x32xf32>
    %176 = arith.addf %175, %174 : vector<8x32xf32>
    %177 = arith.divf %175, %176 : vector<8x32xf32>
    %178 = arith.mulf %169, %150 : vector<8x32xf32>
    %179 = arith.mulf %163, %171 : vector<8x32xf32>
    %180 = arith.addf %178, %179 : vector<8x32xf32>
    %181 = math.tanh %180 : vector<8x32xf32>
    %182 = arith.mulf %177, %181 : vector<8x32xf32>
    %c6_i32 = arith.constant 6 : i32
    %183 = arith.index_cast %c6_i32 : i32 to index
    %c0_38 = arith.constant 0 : index
    %c0_39 = arith.constant 0 : index
    %184 = vector.load %arg0[%183, %c0_38, %c0_39] : memref<8x8x128xf32, #tpu.memory_space<vmem>>, vector<1x8x128xf32>
    %185 = vector.shape_cast %184 : vector<1x8x128xf32> to vector<8x128xf32>
    %cst_40 = arith.constant dense<0.000000e+00> : vector<8x128xf32>
    %186 = tpu.matmul %182, %0, %cst_40 {dimension_numbers = #tpu.dot_dimension_numbers<[1], [0], [0], [1], [0, 0, 1, 1], [], []>} : vector<8x32xf32>, vector<32x128xf32>, vector<8x128xf32> -> vector<8x128xf32>
    %187 = arith.addf %185, %186 : vector<8x128xf32>
    %188 = vector.extract_strided_slice %187 {offsets = [0, 0], sizes = [8, 32], strides = [1, 1]} : vector<8x128xf32> to vector<8x32xf32>
    %189 = arith.negf %188 : vector<8x32xf32>
    %190 = math.exp %189 : vector<8x32xf32>
    %cst_41 = arith.constant 1.000000e+00 : f32
    %191 = vector.broadcast %cst_41 : f32 to vector<8x32xf32>
    %192 = arith.addf %191, %190 : vector<8x32xf32>
    %193 = arith.divf %191, %192 : vector<8x32xf32>
    %194 = vector.extract_strided_slice %187 {offsets = [0, 32], sizes = [8, 32], strides = [1, 1]} : vector<8x128xf32> to vector<8x32xf32>
    %195 = arith.negf %194 : vector<8x32xf32>
    %196 = math.exp %195 : vector<8x32xf32>
    %cst_42 = arith.constant 1.000000e+00 : f32
    %197 = vector.broadcast %cst_42 : f32 to vector<8x32xf32>
    %198 = arith.addf %197, %196 : vector<8x32xf32>
    %199 = arith.divf %197, %198 : vector<8x32xf32>
    %200 = vector.extract_strided_slice %187 {offsets = [0, 64], sizes = [8, 32], strides = [1, 1]} : vector<8x128xf32> to vector<8x32xf32>
    %201 = math.tanh %200 : vector<8x32xf32>
    %202 = vector.extract_strided_slice %187 {offsets = [0, 96], sizes = [8, 32], strides = [1, 1]} : vector<8x128xf32> to vector<8x32xf32>
    %203 = arith.negf %202 : vector<8x32xf32>
    %204 = math.exp %203 : vector<8x32xf32>
    %cst_43 = arith.constant 1.000000e+00 : f32
    %205 = vector.broadcast %cst_43 : f32 to vector<8x32xf32>
    %206 = arith.addf %205, %204 : vector<8x32xf32>
    %207 = arith.divf %205, %206 : vector<8x32xf32>
    %208 = arith.mulf %199, %180 : vector<8x32xf32>
    %209 = arith.mulf %193, %201 : vector<8x32xf32>
    %210 = arith.addf %208, %209 : vector<8x32xf32>
    %211 = math.tanh %210 : vector<8x32xf32>
    %212 = arith.mulf %207, %211 : vector<8x32xf32>
    %c7_i32 = arith.constant 7 : i32
    %213 = arith.index_cast %c7_i32 : i32 to index
    %c0_44 = arith.constant 0 : index
    %c0_45 = arith.constant 0 : index
    %214 = vector.load %arg0[%213, %c0_44, %c0_45] : memref<8x8x128xf32, #tpu.memory_space<vmem>>, vector<1x8x128xf32>
    %215 = vector.shape_cast %214 : vector<1x8x128xf32> to vector<8x128xf32>
    %cst_46 = arith.constant dense<0.000000e+00> : vector<8x128xf32>
    %216 = tpu.matmul %212, %0, %cst_46 {dimension_numbers = #tpu.dot_dimension_numbers<[1], [0], [0], [1], [0, 0, 1, 1], [], []>} : vector<8x32xf32>, vector<32x128xf32>, vector<8x128xf32> -> vector<8x128xf32>
    %217 = arith.addf %215, %216 : vector<8x128xf32>
    %218 = vector.extract_strided_slice %217 {offsets = [0, 0], sizes = [8, 32], strides = [1, 1]} : vector<8x128xf32> to vector<8x32xf32>
    %219 = arith.negf %218 : vector<8x32xf32>
    %220 = math.exp %219 : vector<8x32xf32>
    %cst_47 = arith.constant 1.000000e+00 : f32
    %221 = vector.broadcast %cst_47 : f32 to vector<8x32xf32>
    %222 = arith.addf %221, %220 : vector<8x32xf32>
    %223 = arith.divf %221, %222 : vector<8x32xf32>
    %224 = vector.extract_strided_slice %217 {offsets = [0, 32], sizes = [8, 32], strides = [1, 1]} : vector<8x128xf32> to vector<8x32xf32>
    %225 = arith.negf %224 : vector<8x32xf32>
    %226 = math.exp %225 : vector<8x32xf32>
    %cst_48 = arith.constant 1.000000e+00 : f32
    %227 = vector.broadcast %cst_48 : f32 to vector<8x32xf32>
    %228 = arith.addf %227, %226 : vector<8x32xf32>
    %229 = arith.divf %227, %228 : vector<8x32xf32>
    %230 = vector.extract_strided_slice %217 {offsets = [0, 64], sizes = [8, 32], strides = [1, 1]} : vector<8x128xf32> to vector<8x32xf32>
    %231 = math.tanh %230 : vector<8x32xf32>
    %232 = vector.extract_strided_slice %217 {offsets = [0, 96], sizes = [8, 32], strides = [1, 1]} : vector<8x128xf32> to vector<8x32xf32>
    %233 = arith.negf %232 : vector<8x32xf32>
    %234 = math.exp %233 : vector<8x32xf32>
    %cst_49 = arith.constant 1.000000e+00 : f32
    %235 = vector.broadcast %cst_49 : f32 to vector<8x32xf32>
    %236 = arith.addf %235, %234 : vector<8x32xf32>
    %237 = arith.divf %235, %236 : vector<8x32xf32>
    %238 = arith.mulf %229, %210 : vector<8x32xf32>
    %239 = arith.mulf %223, %231 : vector<8x32xf32>
    %240 = arith.addf %238, %239 : vector<8x32xf32>
    %241 = math.tanh %240 : vector<8x32xf32>
    %242 = arith.mulf %237, %241 : vector<8x32xf32>
    %c8_i32 = arith.constant 8 : i32
    %c0_50 = arith.constant 0 : index
    %c0_51 = arith.constant 0 : index
    %243 = vector.load %arg2[%c0_50, %c0_51] : memref<1x32xf32, #tpu.memory_space<vmem>>, vector<1x32xf32>
    %244 = vector.broadcast %243 : vector<1x32xf32> to vector<8x32xf32>
    %245 = arith.mulf %242, %244 : vector<8x32xf32>
    %cst_52 = arith.constant dense<0.000000e+00> : vector<8xf32>
    %246 = vector.multi_reduction <add>, %245, %cst_52 [1] : vector<8x32xf32> to vector<8xf32>
    %247 = vector.shape_cast %246 : vector<8xf32> to vector<8x1xf32>
    %c0_53 = arith.constant 0 : index
    %c0_54 = arith.constant 0 : index
    %248 = vector.load %arg3[%c0_53, %c0_54] : memref<1x1xf32, #tpu.memory_space<vmem>>, vector<1x1xf32>
    %249 = vector.broadcast %248 : vector<1x1xf32> to vector<8x1xf32>
    %250 = arith.addf %247, %249 : vector<8x1xf32>
    %c0_55 = arith.constant 0 : index
    %c0_56 = arith.constant 0 : index
    %251 = vector.load %arg4[%c0_55, %c0_56] : memref<8x1xf32, #tpu.memory_space<vmem>>, vector<8x1xf32>
    tpu.vector_store %arg4[%c0_55, %c0_56], %250 {strides = array<i32>} : memref<8x1xf32, #tpu.memory_space<vmem>>, vector<8x1xf32>,
    return
  }
}

</mosaic_0001>

<llo_original>
// kernel: tpu_custom_call.1
$region0: #{tpu_custom_call.1}
  #allocation0 [shape = 'u32[]', space=smem, size = 0x4, offset = 0x4, fixed_abs, tag = 'smem constant byte address 0x4 - core index']
  #allocation1 [shape = 'u32[144,128]{1,0:T(1,128)}', space=vmem, size = 0x12000, scoped, tag = 'internal scratch']
  #allocation2 [shape = 'f32[1,1]{1,0:T(1,128)S(1)}', space=vmem, size = 0x200, scoped, tag = 'scoped memory for tpu_custom_call.1']
  %s0 = inlined_call_operand.hbm [shape: f32[8,8,128], index: 0, kind: input, shape index: {}]
  %s1 = inlined_call_operand.hbm [shape: f32[32,128], index: 1, kind: input, shape index: {}]
  %s2 = inlined_call_operand.vmem [shape: f32[1,32], index: 2, kind: input, shape index: {}]
  %s3 = inlined_call_operand.<no memory space> [shape: f32[1,1], index: 3, kind: input, shape index: {}]
  %s4 = inlined_call_operand.vmem [shape: f32[8,1], index: 4, kind: output, shape index: {}]
  %s5 = sld [smem:[#allocation0]]
  $region34: #{tpu_custom_call.1} parent=0
    _
  %s7 = ssub.s32 1, %s5
  %s8 = scalar_select 0, %s7, %s5
  %v9 = vstv %s3
  %10 = vst [vmem:[#allocation2] sm:$0x1] %v9
  $region1: #{tpu_custom_call.1} parent=0
    #allocation3 [shape = 'u8[32768]{0}', space=vmem, size = 0x8000, scoped, tag = 'input window, operand 0, single buffered']
    #allocation4 [shape = 's32[1]{0}', space=sflag, size = 0x4, scoped, tag = 'scoped memory for tpu_custom_call.1']
    #allocation5 [shape = 'u8[16384]{0}', space=vmem, size = 0x4000, scoped, tag = 'input window, operand 1, single buffered']
    #allocation6 [shape = 's32[1]{0}', space=sflag, size = 0x4, scoped, tag = 'scoped memory for tpu_custom_call.1']
    %11 = vsyncpa [#allocation4], 0
    %12 = vsyncpa [#allocation6], 0
    // Predicated region
    $region2: #{tpu_custom_call.1} parent=1 // pred_check
      _
    $region3: #{tpu_custom_call.1} parent=1 // pred_check_branch
      %14 = sbr.rel (0) target = $region5
    $region4: #{tpu_custom_call.1} parent=1 // pred_region
      %s16 = ssub.s32 1024, 1024
      %17 = vsyncadd [#allocation4], %s16
      %s18 = sshll.u32 [#allocation3], 4
      %s19 = int_to_ptr.vmem [resolvable:$true] %s18
      %24 = dma.hbm_to_vmem [thread:$0]  %s0, 1024, %s19, [#allocation4], 128, 128, 8
    $region5: #{tpu_custom_call.1} parent=1 // pred_fallthru
      _
    // Predicated region
    $region6: #{tpu_custom_call.1} parent=1 // pred_check
      _
    $region7: #{tpu_custom_call.1} parent=1 // pred_check_branch
      %26 = sbr.rel (0) target = $region9
    $region8: #{tpu_custom_call.1} parent=1 // pred_region
      %s28 = ssub.s32 512, 512
      %29 = vsyncadd [#allocation6], %s28
      %s30 = sshll.u32 [#allocation5], 4
      %s31 = int_to_ptr.vmem [resolvable:$true] %s30
      %36 = dma.hbm_to_vmem [thread:$0]  %s1, 512, %s31, [#allocation6], 128, 128, 8
    $region9: #{tpu_custom_call.1} parent=1 // pred_fallthru
      _
    // Predicated region
    $region10: #{tpu_custom_call.1} parent=1 // pred_check
      _
    $region11: #{tpu_custom_call.1} parent=1 // pred_check_branch
      %38 = sbr.rel (0) target = $region13
    $region12: #{tpu_custom_call.1} parent=1 // pred_region
      _
    $region13: #{tpu_custom_call.1} parent=1 // pred_fallthru
      _
    // Predicated region
    $region14: #{tpu_custom_call.1} parent=1 // pred_check
      _
    $region15: #{tpu_custom_call.1} parent=1 // pred_check_branch
      %40 = sbr.rel (0) target = $region17
    $region16: #{tpu_custom_call.1} parent=1 // pred_region
      _
    $region17: #{tpu_custom_call.1} parent=1 // pred_fallthru
      _
    // Predicated region
    $region18: #{tpu_custom_call.1} parent=1 // pred_check
      _
    $region19: #{tpu_custom_call.1} parent=1 // pred_check_branch
      %42 = sbr.rel (0) target = $region21
    $region20: #{tpu_custom_call.1} parent=1 // pred_region
      %43 = dma.done [#allocation4], 1024
    $region21: #{tpu_custom_call.1} parent=1 // pred_fallthru
      _
    // Predicated region
    $region22: #{tpu_custom_call.1} parent=1 // pred_check
      _
    $region23: #{tpu_custom_call.1} parent=1 // pred_check_branch
      %45 = sbr.rel (0) target = $region25
    $region24: #{tpu_custom_call.1} parent=1 // pred_region
      %46 = dma.done [#allocation6], 512
    $region25: #{tpu_custom_call.1} parent=1 // pred_fallthru
      _
    %v47 = vld [vmem:[#allocation5] sm:$0xff]
    %v48 = vld [vmem:[#allocation5 + $0x8] sm:$0xff]
    %v49 = vld [vmem:[#allocation5 + $0x10] sm:$0xff]
    %v50 = vld [vmem:[#allocation5 + $0x18] sm:$0xff]
    %v51 = vld [vmem:[#allocation3] sm:$0xff]
    %vm52 = vcmask 261120
    %v54 = vsel %vm52, 0.0, 0
    %56 = vmatprep.subr.mxu0 0.0
    %57 = vmatpush1.msra.mxu0 %v47
    %58 = vmatprep.subr.mxu0 0.0
    %59 = vmatpush1.msra.mxu0 %v48
    %60 = vmatprep.subr.mxu0 0.0
    %61 = vmatpush1.msra.mxu0 %v49
    %62 = vmatprep.subr.mxu0 0.0
    %63 = vmatpush1.msra.mxu0 %v50
    %64 = vmatprep.subr.mxu0 0.0
    %65 = vmatpush1.msra.mxu0 0.0
    %66 = vmatprep.subr.mxu0 0.0
    %67 = vmatpush1.msra.mxu0 0.0
    %68 = vmatprep.subr.mxu0 0.0
    %69 = vmatpush1.msra.mxu0 0.0
    %70 = vmatprep.subr.mxu0 0.0
    %71 = vmatpush1.msra.mxu0 0.0
    %72 = vmatprep.subr.mxu0 0.0
    %73 = vmatpush1.msra.mxu0 0.0
    %74 = vmatprep.subr.mxu0 0.0
    %75 = vmatpush1.msra.mxu0 0.0
    %76 = vmatprep.subr.mxu0 0.0
    %77 = vmatpush1.msra.mxu0 0.0
    %78 = vmatprep.subr.mxu0 0.0
    %79 = vmatpush1.msra.mxu0 0.0
    %80 = vmatprep.subr.mxu0 0.0
    %81 = vmatpush1.msra.mxu0 0.0
    %82 = vmatprep.subr.mxu0 0.0
    %83 = vmatpush1.msra.mxu0 0.0
    %84 = vmatprep.subr.mxu0 0.0
    %85 = vmatpush1.msra.mxu0 0.0
    %86 = vmatprep.subr.mxu0 0.0
    %87 = vmatpush1.msra.mxu0 0.0
    %88 = vmatprep.subr.mxu0 0.0
    %89 = vmatpush1.msra.mxu0 0.0
    %90 = vmatprep.subr.mxu0 0.0
    %91 = vmatpush1.msra.mxu0 0.0
    %92 = vmatprep.subr.mxu0 0.0
    %93 = vmatpush1.msra.mxu0 0.0
    %94 = vmatprep.subr.mxu0 0.0
    %95 = vmatpush1.msra.mxu0 0.0
    %96 = vmatprep.subr.mxu0 0.0
    %97 = vmatpush1.msra.mxu0 0.0
    %98 = vmatprep.subr.mxu0 0.0
    %99 = vmatpush1.msra.mxu0 0.0
    %100 = vmatprep.subr.mxu0 0.0
    %101 = vmatpush1.msra.mxu0 0.0
    %102 = vmatprep.subr.mxu0 0.0
    %103 = vmatpush1.msra.mxu0 0.0
    %104 = vmatprep.subr.mxu0 0.0
    %105 = vmatpush1.msra.mxu0 0.0
    %106 = vmatprep.subr.mxu0 0.0
    %107 = vmatpush1.msra.mxu0 0.0
    %108 = vmatprep.subr.mxu0 0.0
    %109 = vmatpush1.msra.mxu0 0.0
    %110 = vmatprep.subr.mxu0 0.0
    %111 = vmatpush1.msra.mxu0 0.0
    %112 = vmatprep.subr.mxu0 0.0
    %113 = vmatpush1.msra.mxu0 0.0
    %114 = vmatprep.subr.mxu0 0.0
    %115 = vmatpush1.msra.mxu0 0.0
    %116 = vmatprep.subr.mxu0 0.0
    %117 = vmatpush1.msra.mxu0 0.0
    %118 = vmatprep.subr.mxu0 0.0
    %119 = vmatpush1.msra.mxu0 0.0
    %120 = vmatprep.mubr.f32.mxu0 0.0
    %121 = vmatmul.mubr.f32.gmra.mrb[0].mxu0 %v54
    %v122 = vpop.f32.mrb[0].mxu0
    %v123 = vadd.f32 0.0, %v122
    %v124 = vpop.f32.mrb[0].mxu0
    %125 = vdwg.mxu0
    %v126 = vadd.f32 %v51, %v123
    %v127 = vxor.u32 %v126, 2147483648
    %v128 = vmul.f32 %v127, 1.442695
    %v129 = vpow.pop %v128
    %v130 = vadd.f32 %v129, 1.0
    %v131 = vrcp.pop %v130
    %v132 = vmul.f32 1.0, %v131
    %v133 = vtanh.pop %v126
    %v134 = vmul.f32 %v132, 0.0
    %136 = vrot.lane.b32.xlu0 %v133, 64
    %v137 = vpop.permute.xlu0 %136
    %v139 = vmul.f32 %v132, %v137
    %141 = vrot.lane.b32.xlu0 %v139, 32
    %v142 = vpop.permute.xlu0 %141
    %v144 = vadd.f32 %v134, %v142
    %v145 = vtanh.pop %v144
    %147 = vrot.lane.b32.xlu0 %v145, 64
    %v148 = vpop.permute.xlu0 %147
    %v150 = vmul.f32 %v132, %v148
    %s151 = scalar_lea.vmem [#allocation3], 8
    %v152 = vld [vmem:[%s151] sm:$0xff]
    %154 = vrot.lane.b32.xlu0 %v150, 32
    %v155 = vpop.permute.xlu0 %154
    %v156 = vsel %vm52, %v155, 0
    %158 = vmatprep.subr.mxu0 0.0
    %159 = vmatpush1.msra.mxu0 %v47
    %160 = vmatprep.subr.mxu0 0.0
    %161 = vmatpush1.msra.mxu0 %v48
    %162 = vmatprep.subr.mxu0 0.0
    %163 = vmatpush1.msra.mxu0 %v49
    %164 = vmatprep.subr.mxu0 0.0
    %165 = vmatpush1.msra.mxu0 %v50
    %166 = vmatprep.subr.mxu0 0.0
    %167 = vmatpush1.msra.mxu0 0.0
    %168 = vmatprep.subr.mxu0 0.0
    %169 = vmatpush1.msra.mxu0 0.0
    %170 = vmatprep.subr.mxu0 0.0
    %171 = vmatpush1.msra.mxu0 0.0
    %172 = vmatprep.subr.mxu0 0.0
    %173 = vmatpush1.msra.mxu0 0.0
    %174 = vmatprep.subr.mxu0 0.0
    %175 = vmatpush1.msra.mxu0 0.0
    %176 = vmatprep.subr.mxu0 0.0
    %177 = vmatpush1.msra.mxu0 0.0
    %178 = vmatprep.subr.mxu0 0.0
    %179 = vmatpush1.msra.mxu0 0.0
    %180 = vmatprep.subr.mxu0 0.0
    %181 = vmatpush1.msra.mxu0 0.0
    %182 = vmatprep.subr.mxu0 0.0
    %183 = vmatpush1.msra.mxu0 0.0
    %184 = vmatprep.subr.mxu0 0.0
    %185 = vmatpush1.msra.mxu0 0.0
    %186 = vmatprep.subr.mxu0 0.0
    %187 = vmatpush1.msra.mxu0 0.0
    %188 = vmatprep.subr.mxu0 0.0
    %189 = vmatpush1.msra.mxu0 0.0
    %190 = vmatprep.subr.mxu0 0.0
    %191 = vmatpush1.msra.mxu0 0.0
    %192 = vmatprep.subr.mxu0 0.0
    %193 = vmatpush1.msra.mxu0 0.0
    %194 = vmatprep.subr.mxu0 0.0
    %195 = vmatpush1.msra.mxu0 0.0
    %196 = vmatprep.subr.mxu0 0.0
    %197 = vmatpush1.msra.mxu0 0.0
    %198 = vmatprep.subr.mxu0 0.0
    %199 = vmatpush1.msra.mxu0 0.0
    %200 = vmatprep.subr.mxu0 0.0
    %201 = vmatpush1.msra.mxu0 0.0
    %202 = vmatprep.subr.mxu0 0.0
    %203 = vmatpush1.msra.mxu0 0.0
    %204 = vmatprep.subr.mxu0 0.0
    %205 = vmatpush1.msra.mxu0 0.0
    %206 = vmatprep.subr.mxu0 0.0
    %207 = vmatpush1.msra.mxu0 0.0
    %208 = vmatprep.subr.mxu0 0.0
    %209 = vmatpush1.msra.mxu0 0.0
    %210 = vmatprep.subr.mxu0 0.0
    %211 = vmatpush1.msra.mxu0 0.0
    %212 = vmatprep.subr.mxu0 0.0
    %213 = vmatpush1.msra.mxu0 0.0
    %214 = vmatprep.subr.mxu0 0.0
    %215 = vmatpush1.msra.mxu0 0.0
    %216 = vmatprep.subr.mxu0 0.0
    %217 = vmatpush1.msra.mxu0 0.0
    %218 = vmatprep.subr.mxu0 0.0
    %219 = vmatpush1.msra.mxu0 0.0
    %220 = vmatprep.subr.mxu0 0.0
    %221 = vmatpush1.msra.mxu0 0.0
    %222 = vmatprep.mubr.f32.mxu0 0.0
    %223 = vmatmul.mubr.f32.gmra.mrb[0].mxu0 %v156
    %v224 = vpop.f32.mrb[0].mxu0
    %v225 = vadd.f32 0.0, %v224
    %v226 = vpop.f32.mrb[0].mxu0
    %227 = vdwg.mxu0
    %v228 = vadd.f32 %v152, %v225
    %v229 = vxor.u32 %v228, 2147483648
    %v230 = vmul.f32 %v229, 1.442695
    %v231 = vpow.pop %v230
    %v232 = vadd.f32 %v231, 1.0
    %v233 = vrcp.pop %v232
    %v234 = vmul.f32 1.0, %v233
    %v235 = vtanh.pop %v228
    %v236 = vmul.f32 %v234, %v144
    %238 = vrot.lane.b32.xlu0 %v235, 64
    %v239 = vpop.permute.xlu0 %238
    %v241 = vmul.f32 %v234, %v239
    %243 = vrot.lane.b32.xlu0 %v241, 32
    %v244 = vpop.permute.xlu0 %243
    %v246 = vadd.f32 %v236, %v244
    %v247 = vtanh.pop %v246
    %249 = vrot.lane.b32.xlu0 %v247, 64
    %v250 = vpop.permute.xlu0 %249
    %v252 = vmul.f32 %v234, %v250
    %s253 = scalar_lea.vmem [#allocation3], 16
    %v254 = vld [vmem:[%s253] sm:$0xff]
    %256 = vrot.lane.b32.xlu0 %v252, 32
    %v257 = vpop.permute.xlu0 %256
    %v258 = vsel %vm52, %v257, 0
    %260 = vmatprep.subr.mxu0 0.0
    %261 = vmatpush1.msra.mxu0 %v47
    %262 = vmatprep.subr.mxu0 0.0
    %263 = vmatpush1.msra.mxu0 %v48
    %264 = vmatprep.subr.mxu0 0.0
    %265 = vmatpush1.msra.mxu0 %v49
    %266 = vmatprep.subr.mxu0 0.0
    %267 = vmatpush1.msra.mxu0 %v50
    %268 = vmatprep.subr.mxu0 0.0
    %269 = vmatpush1.msra.mxu0 0.0
    %270 = vmatprep.subr.mxu0 0.0
    %271 = vmatpush1.msra.mxu0 0.0
    %272 = vmatprep.subr.mxu0 0.0
    %273 = vmatpush1.msra.mxu0 0.0
    %274 = vmatprep.subr.mxu0 0.0
    %275 = vmatpush1.msra.mxu0 0.0
    %276 = vmatprep.subr.mxu0 0.0
    %277 = vmatpush1.msra.mxu0 0.0
    %278 = vmatprep.subr.mxu0 0.0
    %279 = vmatpush1.msra.mxu0 0.0
    %280 = vmatprep.subr.mxu0 0.0
    %281 = vmatpush1.msra.mxu0 0.0
    %282 = vmatprep.subr.mxu0 0.0
    %283 = vmatpush1.msra.mxu0 0.0
    %284 = vmatprep.subr.mxu0 0.0
    %285 = vmatpush1.msra.mxu0 0.0
    %286 = vmatprep.subr.mxu0 0.0
    %287 = vmatpush1.msra.mxu0 0.0
    %288 = vmatprep.subr.mxu0 0.0
    %289 = vmatpush1.msra.mxu0 0.0
    %290 = vmatprep.subr.mxu0 0.0
    %291 = vmatpush1.msra.mxu0 0.0
    %292 = vmatprep.subr.mxu0 0.0
    %293 = vmatpush1.msra.mxu0 0.0
    %294 = vmatprep.subr.mxu0 0.0
    %295 = vmatpush1.msra.mxu0 0.0
    %296 = vmatprep.subr.mxu0 0.0
    %297 = vmatpush1.msra.mxu0 0.0
    %298 = vmatprep.subr.mxu0 0.0
    %299 = vmatpush1.msra.mxu0 0.0
    %300 = vmatprep.subr.mxu0 0.0
    %301 = vmatpush1.msra.mxu0 0.0
    %302 = vmatprep.subr.mxu0 0.0
    %303 = vmatpush1.msra.mxu0 0.0
    %304 = vmatprep.subr.mxu0 0.0
    %305 = vmatpush1.msra.mxu0 0.0
    %306 = vmatprep.subr.mxu0 0.0
    %307 = vmatpush1.msra.mxu0 0.0
    %308 = vmatprep.subr.mxu0 0.0
    %309 = vmatpush1.msra.mxu0 0.0
    %310 = vmatprep.subr.mxu0 0.0
    %311 = vmatpush1.msra.mxu0 0.0
    %312 = vmatprep.subr.mxu0 0.0
    %313 = vmatpush1.msra.mxu0 0.0
    %314 = vmatprep.subr.mxu0 0.0
    %315 = vmatpush1.msra.mxu0 0.0
    %316 = vmatprep.subr.mxu0 0.0
    %317 = vmatpush1.msra.mxu0 0.0
    %318 = vmatprep.subr.mxu0 0.0
    %319 = vmatpush1.msra.mxu0 0.0
    %320 = vmatprep.subr.mxu0 0.0
    %321 = vmatpush1.msra.mxu0 0.0
    %322 = vmatprep.subr.mxu0 0.0
    %323 = vmatpush1.msra.mxu0 0.0
    %324 = vmatprep.mubr.f32.mxu0 0.0
    %325 = vmatmul.mubr.f32.gmra.mrb[0].mxu0 %v258
    %v326 = vpop.f32.mrb[0].mxu0
    %v327 = vadd.f32 0.0, %v326
    %v328 = vpop.f32.mrb[0].mxu0
    %329 = vdwg.mxu0
    %v330 = vadd.f32 %v254, %v327
    %v331 = vxor.u32 %v330, 2147483648
    %v332 = vmul.f32 %v331, 1.442695
    %v333 = vpow.pop %v332
    %v334 = vadd.f32 %v333, 1.0
    %v335 = vrcp.pop %v334
    %v336 = vmul.f32 1.0, %v335
    %v337 = vtanh.pop %v330
    %v338 = vmul.f32 %v336, %v246
    %340 = vrot.lane.b32.xlu0 %v337, 64
    %v341 = vpop.permute.xlu0 %340
    %v343 = vmul.f32 %v336, %v341
    %345 = vrot.lane.b32.xlu0 %v343, 32
    %v346 = vpop.permute.xlu0 %345
    %v348 = vadd.f32 %v338, %v346
    %v349 = vtanh.pop %v348
    %351 = vrot.lane.b32.xlu0 %v349, 64
    %v352 = vpop.permute.xlu0 %351
    %v354 = vmul.f32 %v336, %v352
    %s355 = scalar_lea.vmem [#allocation3], 24
    %v356 = vld [vmem:[%s355] sm:$0xff]
    %358 = vrot.lane.b32.xlu0 %v354, 32
    %v359 = vpop.permute.xlu0 %358
    %v360 = vsel %vm52, %v359, 0
    %362 = vmatprep.subr.mxu0 0.0
    %363 = vmatpush1.msra.mxu0 %v47
    %364 = vmatprep.subr.mxu0 0.0
    %365 = vmatpush1.msra.mxu0 %v48
    %366 = vmatprep.subr.mxu0 0.0
    %367 = vmatpush1.msra.mxu0 %v49
    %368 = vmatprep.subr.mxu0 0.0
    %369 = vmatpush1.msra.mxu0 %v50
    %370 = vmatprep.subr.mxu0 0.0
    %371 = vmatpush1.msra.mxu0 0.0
    %372 = vmatprep.subr.mxu0 0.0
    %373 = vmatpush1.msra.mxu0 0.0
    %374 = vmatprep.subr.mxu0 0.0
    %375 = vmatpush1.msra.mxu0 0.0
    %376 = vmatprep.subr.mxu0 0.0
    %377 = vmatpush1.msra.mxu0 0.0
    %378 = vmatprep.subr.mxu0 0.0
    %379 = vmatpush1.msra.mxu0 0.0
    %380 = vmatprep.subr.mxu0 0.0
    %381 = vmatpush1.msra.mxu0 0.0
    %382 = vmatprep.subr.mxu0 0.0
    %383 = vmatpush1.msra.mxu0 0.0
    %384 = vmatprep.subr.mxu0 0.0
    %385 = vmatpush1.msra.mxu0 0.0
    %386 = vmatprep.subr.mxu0 0.0
    %387 = vmatpush1.msra.mxu0 0.0
    %388 = vmatprep.subr.mxu0 0.0
    %389 = vmatpush1.msra.mxu0 0.0
    %390 = vmatprep.subr.mxu0 0.0
    %391 = vmatpush1.msra.mxu0 0.0
    %392 = vmatprep.subr.mxu0 0.0
    %393 = vmatpush1.msra.mxu0 0.0
    %394 = vmatprep.subr.mxu0 0.0
    %395 = vmatpush1.msra.mxu0 0.0
    %396 = vmatprep.subr.mxu0 0.0
    %397 = vmatpush1.msra.mxu0 0.0
    %398 = vmatprep.subr.mxu0 0.0
    %399 = vmatpush1.msra.mxu0 0.0
    %400 = vmatprep.subr.mxu0 0.0
    %401 = vmatpush1.msra.mxu0 0.0
    %402 = vmatprep.subr.mxu0 0.0
    %403 = vmatpush1.msra.mxu0 0.0
    %404 = vmatprep.subr.mxu0 0.0
    %405 = vmatpush1.msra.mxu0 0.0
    %406 = vmatprep.subr.mxu0 0.0
    %407 = vmatpush1.msra.mxu0 0.0
    %408 = vmatprep.subr.mxu0 0.0
    %409 = vmatpush1.msra.mxu0 0.0
    %410 = vmatprep.subr.mxu0 0.0
    %411 = vmatpush1.msra.mxu0 0.0
    %412 = vmatprep.subr.mxu0 0.0
    %413 = vmatpush1.msra.mxu0 0.0
    %414 = vmatprep.subr.mxu0 0.0
    %415 = vmatpush1.msra.mxu0 0.0
    %416 = vmatprep.subr.mxu0 0.0
    %417 = vmatpush1.msra.mxu0 0.0
    %418 = vmatprep.subr.mxu0 0.0
    %419 = vmatpush1.msra.mxu0 0.0
    %420 = vmatprep.subr.mxu0 0.0
    %421 = vmatpush1.msra.mxu0 0.0
    %422 = vmatprep.subr.mxu0 0.0
    %423 = vmatpush1.msra.mxu0 0.0
    %424 = vmatprep.subr.mxu0 0.0
    %425 = vmatpush1.msra.mxu0 0.0
    %426 = vmatprep.mubr.f32.mxu0 0.0
    %427 = vmatmul.mubr.f32.gmra.mrb[0].mxu0 %v360
    %v428 = vpop.f32.mrb[0].mxu0
    %v429 = vadd.f32 0.0, %v428
    %v430 = vpop.f32.mrb[0].mxu0
    %431 = vdwg.mxu0
    %v432 = vadd.f32 %v356, %v429
    %v433 = vxor.u32 %v432, 2147483648
    %v434 = vmul.f32 %v433, 1.442695
    %v435 = vpow.pop %v434
    %v436 = vadd.f32 %v435, 1.0
    %v437 = vrcp.pop %v436
    %v438 = vmul.f32 1.0, %v437
    %v439 = vtanh.pop %v432
    %v440 = vmul.f32 %v438, %v348
    %442 = vrot.lane.b32.xlu0 %v439, 64
    %v443 = vpop.permute.xlu0 %442
    %v445 = vmul.f32 %v438, %v443
    %447 = vrot.lane.b32.xlu0 %v445, 32
    %v448 = vpop.permute.xlu0 %447
    %v450 = vadd.f32 %v440, %v448
    %v451 = vtanh.pop %v450
    %453 = vrot.lane.b32.xlu0 %v451, 64
    %v454 = vpop.permute.xlu0 %453
    %v456 = vmul.f32 %v438, %v454
    %s457 = scalar_lea.vmem [#allocation3], 32
    %v458 = vld [vmem:[%s457] sm:$0xff]
    %460 = vrot.lane.b32.xlu0 %v456, 32
    %v461 = vpop.permute.xlu0 %460
    %v462 = vsel %vm52, %v461, 0
    %464 = vmatprep.subr.mxu0 0.0
    %465 = vmatpush1.msra.mxu0 %v47
    %466 = vmatprep.subr.mxu0 0.0
    %467 = vmatpush1.msra.mxu0 %v48
    %468 = vmatprep.subr.mxu0 0.0
    %469 = vmatpush1.msra.mxu0 %v49
    %470 = vmatprep.subr.mxu0 0.0
    %471 = vmatpush1.msra.mxu0 %v50
    %472 = vmatprep.subr.mxu0 0.0
    %473 = vmatpush1.msra.mxu0 0.0
    %474 = vmatprep.subr.mxu0 0.0
    %475 = vmatpush1.msra.mxu0 0.0
    %476 = vmatprep.subr.mxu0 0.0
    %477 = vmatpush1.msra.mxu0 0.0
    %478 = vmatprep.subr.mxu0 0.0
    %479 = vmatpush1.msra.mxu0 0.0
    %480 = vmatprep.subr.mxu0 0.0
    %481 = vmatpush1.msra.mxu0 0.0
    %482 = vmatprep.subr.mxu0 0.0
    %483 = vmatpush1.msra.mxu0 0.0
    %484 = vmatprep.subr.mxu0 0.0
    %485 = vmatpush1.msra.mxu0 0.0
    %486 = vmatprep.subr.mxu0 0.0
    %487 = vmatpush1.msra.mxu0 0.0
    %488 = vmatprep.subr.mxu0 0.0
    %489 = vmatpush1.msra.mxu0 0.0
    %490 = vmatprep.subr.mxu0 0.0
    %491 = vmatpush1.msra.mxu0 0.0
    %492 = vmatprep.subr.mxu0 0.0
    %493 = vmatpush1.msra.mxu0 0.0
    %494 = vmatprep.subr.mxu0 0.0
    %495 = vmatpush1.msra.mxu0 0.0
    %496 = vmatprep.subr.mxu0 0.0
    %497 = vmatpush1.msra.mxu0 0.0
    %498 = vmatprep.subr.mxu0 0.0
    %499 = vmatpush1.msra.mxu0 0.0
    %500 = vmatprep.subr.mxu0 0.0
    %501 = vmatpush1.msra.mxu0 0.0
    %502 = vmatprep.subr.mxu0 0.0
    %503 = vmatpush1.msra.mxu0 0.0
    %504 = vmatprep.subr.mxu0 0.0
    %505 = vmatpush1.msra.mxu0 0.0
    %506 = vmatprep.subr.mxu0 0.0
    %507 = vmatpush1.msra.mxu0 0.0
    %508 = vmatprep.subr.mxu0 0.0
    %509 = vmatpush1.msra.mxu0 0.0
    %510 = vmatprep.subr.mxu0 0.0
    %511 = vmatpush1.msra.mxu0 0.0
    %512 = vmatprep.subr.mxu0 0.0
    %513 = vmatpush1.msra.mxu0 0.0
    %514 = vmatprep.subr.mxu0 0.0
    %515 = vmatpush1.msra.mxu0 0.0
    %516 = vmatprep.subr.mxu0 0.0
    %517 = vmatpush1.msra.mxu0 0.0
    %518 = vmatprep.subr.mxu0 0.0
    %519 = vmatpush1.msra.mxu0 0.0
    %520 = vmatprep.subr.mxu0 0.0
    %521 = vmatpush1.msra.mxu0 0.0
    %522 = vmatprep.subr.mxu0 0.0
    %523 = vmatpush1.msra.mxu0 0.0
    %524 = vmatprep.subr.mxu0 0.0
    %525 = vmatpush1.msra.mxu0 0.0
    %526 = vmatprep.subr.mxu0 0.0
    %527 = vmatpush1.msra.mxu0 0.0
    %528 = vmatprep.mubr.f32.mxu0 0.0
    %529 = vmatmul.mubr.f32.gmra.mrb[0].mxu0 %v462
    %v530 = vpop.f32.mrb[0].mxu0
    %v531 = vadd.f32 0.0, %v530
    %v532 = vpop.f32.mrb[0].mxu0
    %533 = vdwg.mxu0
    %v534 = vadd.f32 %v458, %v531
    %v535 = vxor.u32 %v534, 2147483648
    %v536 = vmul.f32 %v535, 1.442695
    %v537 = vpow.pop %v536
    %v538 = vadd.f32 %v537, 1.0
    %v539 = vrcp.pop %v538
    %v540 = vmul.f32 1.0, %v539
    %v541 = vtanh.pop %v534
    %v542 = vmul.f32 %v540, %v450
    %544 = vrot.lane.b32.xlu0 %v541, 64
    %v545 = vpop.permute.xlu0 %544
    %v547 = vmul.f32 %v540, %v545
    %549 = vrot.lane.b32.xlu0 %v547, 32
    %v550 = vpop.permute.xlu0 %549
    %v552 = vadd.f32 %v542, %v550
    %v553 = vtanh.pop %v552
    %555 = vrot.lane.b32.xlu0 %v553, 64
    %v556 = vpop.permute.xlu0 %555
    %v558 = vmul.f32 %v540, %v556
    %s559 = scalar_lea.vmem [#allocation3], 40
    %v560 = vld [vmem:[%s559] sm:$0xff]
    %562 = vrot.lane.b32.xlu0 %v558, 32
    %v563 = vpop.permute.xlu0 %562
    %v564 = vsel %vm52, %v563, 0
    %566 = vmatprep.subr.mxu0 0.0
    %567 = vmatpush1.msra.mxu0 %v47
    %568 = vmatprep.subr.mxu0 0.0
    %569 = vmatpush1.msra.mxu0 %v48
    %570 = vmatprep.subr.mxu0 0.0
    %571 = vmatpush1.msra.mxu0 %v49
    %572 = vmatprep.subr.mxu0 0.0
    %573 = vmatpush1.msra.mxu0 %v50
    %574 = vmatprep.subr.mxu0 0.0
    %575 = vmatpush1.msra.mxu0 0.0
    %576 = vmatprep.subr.mxu0 0.0
    %577 = vmatpush1.msra.mxu0 0.0
    %578 = vmatprep.subr.mxu0 0.0
    %579 = vmatpush1.msra.mxu0 0.0
    %580 = vmatprep.subr.mxu0 0.0
    %581 = vmatpush1.msra.mxu0 0.0
    %582 = vmatprep.subr.mxu0 0.0
    %583 = vmatpush1.msra.mxu0 0.0
    %584 = vmatprep.subr.mxu0 0.0
    %585 = vmatpush1.msra.mxu0 0.0
    %586 = vmatprep.subr.mxu0 0.0
    %587 = vmatpush1.msra.mxu0 0.0
    %588 = vmatprep.subr.mxu0 0.0
    %589 = vmatpush1.msra.mxu0 0.0
    %590 = vmatprep.subr.mxu0 0.0
    %591 = vmatpush1.msra.mxu0 0.0
    %592 = vmatprep.subr.mxu0 0.0
    %593 = vmatpush1.msra.mxu0 0.0
    %594 = vmatprep.subr.mxu0 0.0
    %595 = vmatpush1.msra.mxu0 0.0
    %596 = vmatprep.subr.mxu0 0.0
    %597 = vmatpush1.msra.mxu0 0.0
    %598 = vmatprep.subr.mxu0 0.0
    %599 = vmatpush1.msra.mxu0 0.0
    %600 = vmatprep.subr.mxu0 0.0
    %601 = vmatpush1.msra.mxu0 0.0
    %602 = vmatprep.subr.mxu0 0.0
    %603 = vmatpush1.msra.mxu0 0.0
    %604 = vmatprep.subr.mxu0 0.0
    %605 = vmatpush1.msra.mxu0 0.0
    %606 = vmatprep.subr.mxu0 0.0
    %607 = vmatpush1.msra.mxu0 0.0
    %608 = vmatprep.subr.mxu0 0.0
    %609 = vmatpush1.msra.mxu0 0.0
    %610 = vmatprep.subr.mxu0 0.0
    %611 = vmatpush1.msra.mxu0 0.0
    %612 = vmatprep.subr.mxu0 0.0
    %613 = vmatpush1.msra.mxu0 0.0
    %614 = vmatprep.subr.mxu0 0.0
    %615 = vmatpush1.msra.mxu0 0.0
    %616 = vmatprep.subr.mxu0 0.0
    %617 = vmatpush1.msra.mxu0 0.0
    %618 = vmatprep.subr.mxu0 0.0
    %619 = vmatpush1.msra.mxu0 0.0
    %620 = vmatprep.subr.mxu0 0.0
    %621 = vmatpush1.msra.mxu0 0.0
    %622 = vmatprep.subr.mxu0 0.0
    %623 = vmatpush1.msra.mxu0 0.0
    %624 = vmatprep.subr.mxu0 0.0
    %625 = vmatpush1.msra.mxu0 0.0
    %626 = vmatprep.subr.mxu0 0.0
    %627 = vmatpush1.msra.mxu0 0.0
    %628 = vmatprep.subr.mxu0 0.0
    %629 = vmatpush1.msra.mxu0 0.0
    %630 = vmatprep.mubr.f32.mxu0 0.0
    %631 = vmatmul.mubr.f32.gmra.mrb[0].mxu0 %v564
    %v632 = vpop.f32.mrb[0].mxu0
    %v633 = vadd.f32 0.0, %v632
    %v634 = vpop.f32.mrb[0].mxu0
    %635 = vdwg.mxu0
    %v636 = vadd.f32 %v560, %v633
    %v637 = vxor.u32 %v636, 2147483648
    %v638 = vmul.f32 %v637, 1.442695
    %v639 = vpow.pop %v638
    %v640 = vadd.f32 %v639, 1.0
    %v641 = vrcp.pop %v640
    %v642 = vmul.f32 1.0, %v641
    %v643 = vtanh.pop %v636
    %v644 = vmul.f32 %v642, %v552
    %646 = vrot.lane.b32.xlu0 %v643, 64
    %v647 = vpop.permute.xlu0 %646
    %v649 = vmul.f32 %v642, %v647
    %651 = vrot.lane.b32.xlu0 %v649, 32
    %v652 = vpop.permute.xlu0 %651
    %v654 = vadd.f32 %v644, %v652
    %v655 = vtanh.pop %v654
    %657 = vrot.lane.b32.xlu0 %v655, 64
    %v658 = vpop.permute.xlu0 %657
    %v660 = vmul.f32 %v642, %v658
    %s661 = scalar_lea.vmem [#allocation3], 48
    %v662 = vld [vmem:[%s661] sm:$0xff]
    %664 = vrot.lane.b32.xlu0 %v660, 32
    %v665 = vpop.permute.xlu0 %664
    %v666 = vsel %vm52, %v665, 0
    %668 = vmatprep.subr.mxu0 0.0
    %669 = vmatpush1.msra.mxu0 %v47
    %670 = vmatprep.subr.mxu0 0.0
    %671 = vmatpush1.msra.mxu0 %v48
    %672 = vmatprep.subr.mxu0 0.0
    %673 = vmatpush1.msra.mxu0 %v49
    %674 = vmatprep.subr.mxu0 0.0
    %675 = vmatpush1.msra.mxu0 %v50
    %676 = vmatprep.subr.mxu0 0.0
    %677 = vmatpush1.msra.mxu0 0.0
    %678 = vmatprep.subr.mxu0 0.0
    %679 = vmatpush1.msra.mxu0 0.0
    %680 = vmatprep.subr.mxu0 0.0
    %681 = vmatpush1.msra.mxu0 0.0
    %682 = vmatprep.subr.mxu0 0.0
    %683 = vmatpush1.msra.mxu0 0.0
    %684 = vmatprep.subr.mxu0 0.0
    %685 = vmatpush1.msra.mxu0 0.0
    %686 = vmatprep.subr.mxu0 0.0
    %687 = vmatpush1.msra.mxu0 0.0
    %688 = vmatprep.subr.mxu0 0.0
    %689 = vmatpush1.msra.mxu0 0.0
    %690 = vmatprep.subr.mxu0 0.0
    %691 = vmatpush1.msra.mxu0 0.0
    %692 = vmatprep.subr.mxu0 0.0
    %693 = vmatpush1.msra.mxu0 0.0
    %694 = vmatprep.subr.mxu0 0.0
    %695 = vmatpush1.msra.mxu0 0.0
    %696 = vmatprep.subr.mxu0 0.0
    %697 = vmatpush1.msra.mxu0 0.0
    %698 = vmatprep.subr.mxu0 0.0
    %699 = vmatpush1.msra.mxu0 0.0
    %700 = vmatprep.subr.mxu0 0.0
    %701 = vmatpush1.msra.mxu0 0.0
    %702 = vmatprep.subr.mxu0 0.0
    %703 = vmatpush1.msra.mxu0 0.0
    %704 = vmatprep.subr.mxu0 0.0
    %705 = vmatpush1.msra.mxu0 0.0
    %706 = vmatprep.subr.mxu0 0.0
    %707 = vmatpush1.msra.mxu0 0.0
    %708 = vmatprep.subr.mxu0 0.0
    %709 = vmatpush1.msra.mxu0 0.0
    %710 = vmatprep.subr.mxu0 0.0
    %711 = vmatpush1.msra.mxu0 0.0
    %712 = vmatprep.subr.mxu0 0.0
    %713 = vmatpush1.msra.mxu0 0.0
    %714 = vmatprep.subr.mxu0 0.0
    %715 = vmatpush1.msra.mxu0 0.0
    %716 = vmatprep.subr.mxu0 0.0
    %717 = vmatpush1.msra.mxu0 0.0
    %718 = vmatprep.subr.mxu0 0.0
    %719 = vmatpush1.msra.mxu0 0.0
    %720 = vmatprep.subr.mxu0 0.0
    %721 = vmatpush1.msra.mxu0 0.0
    %722 = vmatprep.subr.mxu0 0.0
    %723 = vmatpush1.msra.mxu0 0.0
    %724 = vmatprep.subr.mxu0 0.0
    %725 = vmatpush1.msra.mxu0 0.0
    %726 = vmatprep.subr.mxu0 0.0
    %727 = vmatpush1.msra.mxu0 0.0
    %728 = vmatprep.subr.mxu0 0.0
    %729 = vmatpush1.msra.mxu0 0.0
    %730 = vmatprep.subr.mxu0 0.0
    %731 = vmatpush1.msra.mxu0 0.0
    %732 = vmatprep.mubr.f32.mxu0 0.0
    %733 = vmatmul.mubr.f32.gmra.mrb[0].mxu0 %v666
    %v734 = vpop.f32.mrb[0].mxu0
    %v735 = vadd.f32 0.0, %v734
    %v736 = vpop.f32.mrb[0].mxu0
    %737 = vdwg.mxu0
    %v738 = vadd.f32 %v662, %v735
    %v739 = vxor.u32 %v738, 2147483648
    %v740 = vmul.f32 %v739, 1.442695
    %v741 = vpow.pop %v740
    %v742 = vadd.f32 %v741, 1.0
    %v743 = vrcp.pop %v742
    %v744 = vmul.f32 1.0, %v743
    %v745 = vtanh.pop %v738
    %v746 = vmul.f32 %v744, %v654
    %748 = vrot.lane.b32.xlu0 %v745, 64
    %v749 = vpop.permute.xlu0 %748
    %v751 = vmul.f32 %v744, %v749
    %753 = vrot.lane.b32.xlu0 %v751, 32
    %v754 = vpop.permute.xlu0 %753
    %v756 = vadd.f32 %v746, %v754
    %v757 = vtanh.pop %v756
    %759 = vrot.lane.b32.xlu0 %v757, 64
    %v760 = vpop.permute.xlu0 %759
    %v762 = vmul.f32 %v744, %v760
    %s763 = scalar_lea.vmem [#allocation3], 56
    %v764 = vld [vmem:[%s763] sm:$0xff]
    %766 = vrot.lane.b32.xlu0 %v762, 32
    %v767 = vpop.permute.xlu0 %766
    %v768 = vsel %vm52, %v767, 0
    %770 = vmatprep.subr.mxu0 0.0
    %771 = vmatpush1.msra.mxu0 %v47
    %772 = vmatprep.subr.mxu0 0.0
    %773 = vmatpush1.msra.mxu0 %v48
    %774 = vmatprep.subr.mxu0 0.0
    %775 = vmatpush1.msra.mxu0 %v49
    %776 = vmatprep.subr.mxu0 0.0
    %777 = vmatpush1.msra.mxu0 %v50
    %778 = vmatprep.subr.mxu0 0.0
    %779 = vmatpush1.msra.mxu0 0.0
    %780 = vmatprep.subr.mxu0 0.0
    %781 = vmatpush1.msra.mxu0 0.0
    %782 = vmatprep.subr.mxu0 0.0
    %783 = vmatpush1.msra.mxu0 0.0
    %784 = vmatprep.subr.mxu0 0.0
    %785 = vmatpush1.msra.mxu0 0.0
    %786 = vmatprep.subr.mxu0 0.0
    %787 = vmatpush1.msra.mxu0 0.0
    %788 = vmatprep.subr.mxu0 0.0
    %789 = vmatpush1.msra.mxu0 0.0
    %790 = vmatprep.subr.mxu0 0.0
    %791 = vmatpush1.msra.mxu0 0.0
    %792 = vmatprep.subr.mxu0 0.0
    %793 = vmatpush1.msra.mxu0 0.0
    %794 = vmatprep.subr.mxu0 0.0
    %795 = vmatpush1.msra.mxu0 0.0
    %796 = vmatprep.subr.mxu0 0.0
    %797 = vmatpush1.msra.mxu0 0.0
    %798 = vmatprep.subr.mxu0 0.0
    %799 = vmatpush1.msra.mxu0 0.0
    %800 = vmatprep.subr.mxu0 0.0
    %801 = vmatpush1.msra.mxu0 0.0
    %802 = vmatprep.subr.mxu0 0.0
    %803 = vmatpush1.msra.mxu0 0.0
    %804 = vmatprep.subr.mxu0 0.0
    %805 = vmatpush1.msra.mxu0 0.0
    %806 = vmatprep.subr.mxu0 0.0
    %807 = vmatpush1.msra.mxu0 0.0
    %808 = vmatprep.subr.mxu0 0.0
    %809 = vmatpush1.msra.mxu0 0.0
    %810 = vmatprep.subr.mxu0 0.0
    %811 = vmatpush1.msra.mxu0 0.0
    %812 = vmatprep.subr.mxu0 0.0
    %813 = vmatpush1.msra.mxu0 0.0
    %814 = vmatprep.subr.mxu0 0.0
    %815 = vmatpush1.msra.mxu0 0.0
    %816 = vmatprep.subr.mxu0 0.0
    %817 = vmatpush1.msra.mxu0 0.0
    %818 = vmatprep.subr.mxu0 0.0
    %819 = vmatpush1.msra.mxu0 0.0
    %820 = vmatprep.subr.mxu0 0.0
    %821 = vmatpush1.msra.mxu0 0.0
    %822 = vmatprep.subr.mxu0 0.0
    %823 = vmatpush1.msra.mxu0 0.0
    %824 = vmatprep.subr.mxu0 0.0
    %825 = vmatpush1.msra.mxu0 0.0
    %826 = vmatprep.subr.mxu0 0.0
    %827 = vmatpush1.msra.mxu0 0.0
    %828 = vmatprep.subr.mxu0 0.0
    %829 = vmatpush1.msra.mxu0 0.0
    %830 = vmatprep.subr.mxu0 0.0
    %831 = vmatpush1.msra.mxu0 0.0
    %832 = vmatprep.subr.mxu0 0.0
    %833 = vmatpush1.msra.mxu0 0.0
    %834 = vmatprep.mubr.f32.mxu0 0.0
    %835 = vmatmul.mubr.f32.gmra.mrb[0].mxu0 %v768
    %v836 = vpop.f32.mrb[0].mxu0
    %v837 = vadd.f32 0.0, %v836
    %v838 = vpop.f32.mrb[0].mxu0
    %839 = vdwg.mxu0
    %v840 = vadd.f32 %v764, %v837
    %v841 = vxor.u32 %v840, 2147483648
    %v842 = vmul.f32 %v841, 1.442695
    %v843 = vpow.pop %v842
    %v844 = vadd.f32 %v843, 1.0
    %v845 = vrcp.pop %v844
    %v846 = vmul.f32 1.0, %v845
    %v847 = vtanh.pop %v840
    %v848 = vmul.f32 %v846, %v756
    %850 = vrot.lane.b32.xlu0 %v847, 64
    %v851 = vpop.permute.xlu0 %850
    %v853 = vmul.f32 %v846, %v851
    %855 = vrot.lane.b32.xlu0 %v853, 32
    %v856 = vpop.permute.xlu0 %855
    %v858 = vadd.f32 %v848, %v856
    %v859 = vtanh.pop %v858
    %861 = vrot.lane.b32.xlu0 %v859, 64
    %v862 = vpop.permute.xlu0 %861
    %v864 = vmul.f32 %v846, %v862
    %v865 = vld [vmem:[%s2] sm:$0x1]
    %v867 = vlaneseq
    %v868 = vshrl.u32 %v867, 7
    %v869 = vsub.s32 0, %v868
    %v870 = vrot.slane %v865, %v869
    %871 = vrot.lane.b32.xlu0 %v870, 96
    %v872 = vpop.permute.xlu0 %871
    %v874 = vmul.f32 %v864, %v872
    %876 = vrot.lane.b32.xlu0 %v874, 32
    %v877 = vpop.permute.xlu0 %876
    %v879 = vsel %vm52, %v877, 0.0
    %880 = vadd.xlane.f32.xlu0 %v879
    %v881 = vpop.xlane.xlu0 %880
    %v882 = vld [vmem:[#allocation2] sm:$0x1]
    %v884 = vlaneseq
    %v885 = vshrl.u32 %v884, 7
    %v886 = vsub.s32 0, %v885
    %v887 = vrot.slane %v882, %v886
    %v889 = vadd.f32 %v881, %v887
    %vm890 = vcmask 7168
    %891 = vst.msk [vmem:[%s4] sm:$0xff] %vm890, %v889
    // Predicated region
    $region26: #{tpu_custom_call.1} parent=1 // pred_check
      _
    $region27: #{tpu_custom_call.1} parent=1 // pred_check_branch
      %893 = sbr.rel (0) target = $region29
    $region28: #{tpu_custom_call.1} parent=1 // pred_region
      _
    $region29: #{tpu_custom_call.1} parent=1 // pred_fallthru
      _
    // Predicated region
    $region30: #{tpu_custom_call.1} parent=1 // pred_check
      _
    $region31: #{tpu_custom_call.1} parent=1 // pred_check_branch
      %895 = sbr.rel (0) target = $region33
    $region32: #{tpu_custom_call.1} parent=1 // pred_region
      _
    $region33: #{tpu_custom_call.1} parent=1 // pred_fallthru
      _
    %896 = vsyncpa [#allocation4], 1
    %897 = vsyncpa [#allocation6], 1

</llo_original>
